<compile_context>
chip_gen: v7x
topology: tpu7x:2x2x1
jax: 0.10.0
libtpu: 0.0.40
codegen_flags: <defaults>
</compile_context>

<pallas_src>
import functools

import jax
import jax.numpy as jnp
from jax.experimental import pallas as pl
from jax.experimental.pallas import tpu as pltpu


LANE = 128  # lane-dense label width for the padded output slab


def _round_up(a, m):
    return (a + m - 1) // m * m


def luke_tagger_head_kernel(x_ref, w_ref, b_ref, out_ref, *, pred_col):
    """One token tile: linear -> log_softmax -> argmax, all lane-dense.

    x_ref   : [TILE_N, H]   bf16
    w_ref   : [H, 128]      bf16 (labels zero-padded to 128)
    b_ref   : [1, 128]      f32  (padded columns hold -1e30)
    out_ref : [TILE_N, 128] f32  (cols 0..L-1 = log-probs, col L = argmax id)
    """
    x = x_ref[...]                                    # bf16, feeds MXU directly
    w = w_ref[...]
    b = b_ref[...]

    # Linear: f32 accumulation on the MXU; padded label columns get -1e30.
    logits = jnp.dot(x, w, preferred_element_type=jnp.float32) + b   # [TN, 128]

    # Numerically stable log_softmax along the label (lane) axis.
    m = jnp.max(logits, axis=-1, keepdims=True)
    shifted = logits - m
    # exp(-1e30 - m) == 0 exactly, so padded columns do not perturb the lse.
    lse = jnp.log(jnp.sum(jnp.exp(shifted), axis=-1, keepdims=True))
    logp = shifted - lse

    # argmax(log_softmax(z)) == argmax(z): reuse `m`, no second reduction over
    # logp.  First-occurrence tie-break via min over matching lane ids.
    ids = jax.lax.broadcasted_iota(jnp.int32, logits.shape, 1)
    is_max = shifted >= 0.0
    pred = jnp.min(jnp.where(is_max, ids, logits.shape[-1]),
                   axis=-1, keepdims=True)            # [TN, 1] int32, in [0, L)

    # Fold the prediction (exactly representable small int) into column L of
    # the lane-dense slab -> single unmasked 128-wide store.
    out_ref[...] = jnp.where(ids == pred_col, pred.astype(jnp.float32), logp)


def luke_tagger_mlp_forward(hidden, w, b, seq_length, tile_n=512):
    """hidden: [B, S, H] encoder output; w: [H, L]; b: [L].

    Returns (predict [B*S // seq_length, seq_length] int32,
             log_probs [B*S, L] float32).
    """
    B, S, H = hidden.shape
    N = B * S
    L = w.shape[1]
    assert L + 1 <= LANE, "labels_num must fit (with the pred column) in 128 lanes"

    # Tokens-major; bf16 halves the dominant x HBM read and feeds the MXU.
    x = hidden.reshape(N, H).astype(jnp.bfloat16)

    # Pad the label dim to 128 lanes.  Padded weight columns are zero and the
    # padded bias is -1e30, so padded logits never win the max and add exactly
    # zero to the softmax denominator.
    w_p = jnp.zeros((H, LANE), jnp.bfloat16).at[:, :L].set(w.astype(jnp.bfloat16))
    b_p = jnp.full((1, LANE), -1e30, jnp.float32).at[0, :L].set(b.astype(jnp.float32))

    # Token tiling: TILE_N rows per grid step (multiple of 8 sublanes).
    tile = min(tile_n, _round_up(N, 8))
    num_tiles = pl.cdiv(N, tile)
    n_pad = num_tiles * tile
    if n_pad != N:
        x = jnp.pad(x, ((0, n_pad - N), (0, 0)))

    kernel = functools.partial(luke_tagger_head_kernel, pred_col=L)

    slab = pl.pallas_call(
        kernel,
        out_shape=jax.ShapeDtypeStruct((n_pad, LANE), jnp.float32),
        grid=(num_tiles,),
        in_specs=[
            pl.BlockSpec((tile, H), lambda i: (i, 0)),
            pl.BlockSpec((H, LANE), lambda i: (0, 0)),
            pl.BlockSpec((1, LANE), lambda i: (0, 0)),
        ],
        out_specs=pl.BlockSpec((tile, LANE), lambda i: (i, 0)),
        compiler_params=pltpu.CompilerParams(
            dimension_semantics=("parallel",),
        ),
    )(x, w_p, b_p)

    logp = slab[:N, :L]
    predict = slab[:N, L].astype(jnp.int32).reshape(-1, seq_length)
    return predict, logp


if __name__ == "__main__":
    # Small, forward-consistent shapes.
    B, S, H, L, V = 2, 8, 32, 9, 100   # batch, seq_length, hidden_size, labels_num, vocab

    key = jax.random.PRNGKey(0)
    k_ids, k_emb, k_w, k_b = jax.random.split(key, 4)

    word_ids = jax.random.randint(k_ids, (B, S), 0, V)
    word_attention_mask = jnp.ones((B, S), jnp.float32)

    # TODO(synk): the external LUKE encoder has no Pallas equivalent here; it is
    # stubbed with a deterministic embedding lookup producing word_sequence_output.
    emb_table = jax.random.normal(k_emb, (V, H), jnp.float32) * 0.02
    word_sequence_output = emb_table[word_ids] * word_attention_mask[..., None]

    # output_layer = nn.Linear(hidden_size, labels_num): weight [H, L], bias [L]
    w = jax.random.normal(k_w, (H, L), jnp.float32) * (1.0 / jnp.sqrt(H))
    b = jax.random.normal(k_b, (L,), jnp.float32) * 0.01

    predict, logp = luke_tagger_mlp_forward(word_sequence_output, w, b, S)
    predict = jax.block_until_ready(predict)

    # Pure-JAX reference of the head (same bf16-input matmul precision).
    xf = word_sequence_output.reshape(-1, H)
    logits_ref = jnp.dot(xf.astype(jnp.bfloat16), w.astype(jnp.bfloat16),
                         preferred_element_type=jnp.float32) + b
    logp_ref = jax.nn.log_softmax(logits_ref, axis=-1)
    pred_ref = jnp.argmax(logits_ref, axis=-1).astype(jnp.int32).reshape(-1, S)

    assert predict.shape == (B, S)
    assert predict.dtype == jnp.int32
    assert jnp.allclose(logp, logp_ref, atol=1e-5), "log_softmax mismatch"
    assert jnp.array_equal(predict, pred_ref), "argmax mismatch"

    print("KERNEL_OK")
</pallas_src>

<mosaic_0001>
module attributes {stable_mosaic.version = 11 : i64} {
  func.func @luke_tagger_head_kernel(%arg0: i32, %arg1: memref<16x32xbf16, #tpu.memory_space<vmem>>, %arg2: memref<32x128xbf16, #tpu.memory_space<vmem>>, %arg3: memref<1x128xf32, #tpu.memory_space<vmem>>, %arg4: memref<16x128xf32, #tpu.memory_space<vmem>>) attributes {dimension_semantics = [#tpu.dimension_semantics<parallel>], iteration_bounds = array<i64: 1>, scalar_prefetch = 0 : i64, scratch_operands = 0 : i64, tpu.core_type = #tpu.core_type<tc>, window_params = [{transform_indices = @transform_0, window_bounds = array<i64: 16, 32>}, {pipeline_mode = #tpu.pipeline_mode<synchronous>, transform_indices = @transform_1, window_bounds = array<i64: 32, 128>}, {pipeline_mode = #tpu.pipeline_mode<synchronous>, transform_indices = @transform_2, window_bounds = array<i64: 1, 128>}, {transform_indices = @transform_3, window_bounds = array<i64: 16, 128>}]} {
    %c0 = arith.constant 0 : index
    %c0_0 = arith.constant 0 : index
    %0 = vector.load %arg1[%c0, %c0_0] : memref<16x32xbf16, #tpu.memory_space<vmem>>, vector<16x32xbf16>
    %c0_1 = arith.constant 0 : index
    %c0_2 = arith.constant 0 : index
    %1 = vector.load %arg2[%c0_1, %c0_2] : memref<32x128xbf16, #tpu.memory_space<vmem>>, vector<32x128xbf16>
    %c0_3 = arith.constant 0 : index
    %c0_4 = arith.constant 0 : index
    %2 = vector.load %arg3[%c0_3, %c0_4] : memref<1x128xf32, #tpu.memory_space<vmem>>, vector<1x128xf32>
    %cst = arith.constant dense<0.000000e+00> : vector<16x128xf32>
    %3 = tpu.matmul %0, %1, %cst {dimension_numbers = #tpu.dot_dimension_numbers<[1], [0], [0], [1], [0, 0, 1, 1], [], []>} : vector<16x32xbf16>, vector<32x128xbf16>, vector<16x128xf32> -> vector<16x128xf32>
    %4 = vector.broadcast %2 : vector<1x128xf32> to vector<16x128xf32>
    %5 = arith.addf %3, %4 : vector<16x128xf32>
    %cst_5 = arith.constant dense<0xFF800000> : vector<16xf32>
    %6 = vector.multi_reduction <maximumf>, %5, %cst_5 [1] : vector<16x128xf32> to vector<16xf32>
    %7 = vector.shape_cast %6 : vector<16xf32> to vector<16x1xf32>
    %8 = vector.broadcast %7 : vector<16x1xf32> to vector<16x128xf32>
    %9 = arith.subf %5, %8 : vector<16x128xf32>
    %10 = math.exp %9 : vector<16x128xf32>
    %cst_6 = arith.constant dense<0.000000e+00> : vector<16xf32>
    %11 = vector.multi_reduction <add>, %10, %cst_6 [1] : vector<16x128xf32> to vector<16xf32>
    %12 = vector.shape_cast %11 : vector<16xf32> to vector<16x1xf32>
    %13 = math.log %12 : vector<16x1xf32>
    %14 = vector.broadcast %13 : vector<16x1xf32> to vector<16x128xf32>
    %15 = arith.subf %9, %14 : vector<16x128xf32>
    %16 = tpu.iota {dimensions = array<i32: 1>} : vector<16x128xi32>
    %cst_7 = arith.constant 0.000000e+00 : f32
    %17 = vector.broadcast %cst_7 : f32 to vector<16x128xf32>
    %18 = arith.cmpf oge, %9, %17 : vector<16x128xf32>
    %c128_i32 = arith.constant 128 : i32
    %19 = vector.broadcast %c128_i32 : i32 to vector<16x128xi32>
    %20 = arith.select %18, %16, %19 : vector<16x128xi1>, vector<16x128xi32>
    %cst_8 = arith.constant dense<2147483647> : vector<16xi32>
    %21 = vector.multi_reduction <minsi>, %20, %cst_8 [1] : vector<16x128xi32> to vector<16xi32>
    %22 = vector.shape_cast %21 : vector<16xi32> to vector<16x1xi32>
    %c9_i32 = arith.constant 9 : i32
    %23 = vector.broadcast %c9_i32 : i32 to vector<16x128xi32>
    %24 = arith.cmpi eq, %16, %23 : vector<16x128xi32>
    %25 = arith.sitofp %22 : vector<16x1xi32> to vector<16x1xf32>
    %26 = vector.shape_cast %25 : vector<16x1xf32> to vector<16x1xf32>
    %27 = vector.broadcast %26 : vector<16x1xf32> to vector<16x128xf32>
    %28 = arith.select %24, %27, %15 : vector<16x128xi1>, vector<16x128xf32>
    %c0_9 = arith.constant 0 : index
    %c0_10 = arith.constant 0 : index
    %29 = vector.load %arg4[%c0_9, %c0_10] : memref<16x128xf32, #tpu.memory_space<vmem>>, vector<16x128xf32>
    tpu.vector_store %arg4[%c0_9, %c0_10], %28 {strides = array<i32>} : memref<16x128xf32, #tpu.memory_space<vmem>>, vector<16x128xf32>,
    return
  }
  func.func @transform_0(%arg0: i32) -> (i32, i32) {
    %c0_i32 = arith.constant 0 : i32
    %c0_i32_0 = arith.constant 0 : i32
    return %arg0, %c0_i32 : i32, i32
  }
  func.func @transform_1(%arg0: i32) -> (i32, i32) {
    %c0_i32 = arith.constant 0 : i32
    %c0_i32_0 = arith.constant 0 : i32
    %c0_i32_1 = arith.constant 0 : i32
    return %c0_i32, %c0_i32_0 : i32, i32
  }
  func.func @transform_2(%arg0: i32) -> (i32, i32) {
    %c0_i32 = arith.constant 0 : i32
    %c0_i32_0 = arith.constant 0 : i32
    %c0_i32_1 = arith.constant 0 : i32
    return %c0_i32, %c0_i32_0 : i32, i32
  }
  func.func @transform_3(%arg0: i32) -> (i32, i32) {
    %c0_i32 = arith.constant 0 : i32
    %c0_i32_0 = arith.constant 0 : i32
    return %arg0, %c0_i32 : i32, i32
  }
}

</mosaic_0001>

<llo_original>
// kernel: tpu_custom_call.1
$region0: #{tpu_custom_call.1}
  #allocation0 [shape = 'u32[]', space=smem, size = 0x4, offset = 0x4, fixed_abs, tag = 'smem constant byte address 0x4 - core index']
  #allocation1 [shape = 'u32[144,128]{1,0:T(1,128)}', space=vmem, size = 0x12000, scoped, tag = 'internal scratch']
  %s0 = inlined_call_operand.hbm [shape: bf16[16,32], index: 0, kind: input, shape index: {}]
  %s1 = inlined_call_operand.hbm [shape: bf16[32,128], index: 1, kind: input, shape index: {}]
  %s2 = inlined_call_operand.vmem [shape: f32[1,128], index: 2, kind: input, shape index: {}]
  %s3 = inlined_call_operand.hbm [shape: f32[16,128], index: 3, kind: output, shape index: {}]
  %s4 = sld [smem:[#allocation0]]
  $region30: #{tpu_custom_call.1} parent=0
    _
  %s6 = ssub.s32 1, %s4
  %s7 = scalar_select 0, %s6, %s4
  $region1: #{tpu_custom_call.1} parent=0
    #allocation2 [shape = 'u8[4096]{0}', space=vmem, size = 0x1000, scoped, tag = 'input window, operand 0, single buffered']
    #allocation3 [shape = 's32[1]{0}', space=sflag, size = 0x4, scoped, tag = 'scoped memory for tpu_custom_call.1']
    #allocation4 [shape = 's32[1]{0}', space=sflag, size = 0x4, scoped, tag = 'scoped memory for tpu_custom_call.1']
    #allocation5 [shape = 'u8[8192]{0}', space=vmem, size = 0x2000, scoped, tag = 'input window, operand 1, single buffered']
    #allocation6 [shape = 's32[1]{0}', space=sflag, size = 0x4, scoped, tag = 'scoped memory for tpu_custom_call.1']
    #allocation7 [shape = 'u8[8192]{0}', space=vmem, size = 0x2000, scoped, tag = 'output window, operand 0, single buffered']
    %8 = vsyncpa [#allocation3], 0
    %9 = vsyncpa [#allocation6], 0
    %10 = vsyncpa [#allocation4], 0
    // Predicated region
    $region2: #{tpu_custom_call.1} parent=1 // pred_check
      _
    $region3: #{tpu_custom_call.1} parent=1 // pred_check_branch
      %12 = sbr.rel (0) target = $region5
    $region4: #{tpu_custom_call.1} parent=1 // pred_region
      %s14 = ssub.s32 128, 128
      %15 = vsyncadd [#allocation3], %s14
      %s16 = sshll.u32 [#allocation2], 4
      %s17 = int_to_ptr.vmem [resolvable:$true] %s16
      %22 = dma.hbm_to_vmem [thread:$0]  %s0, 128, %s17, [#allocation3], 64, 64, 4
    $region5: #{tpu_custom_call.1} parent=1 // pred_fallthru
      _
    // Predicated region
    $region6: #{tpu_custom_call.1} parent=1 // pred_check
      _
    $region7: #{tpu_custom_call.1} parent=1 // pred_check_branch
      %24 = sbr.rel (0) target = $region9
    $region8: #{tpu_custom_call.1} parent=1 // pred_region
      %s26 = ssub.s32 256, 256
      %27 = vsyncadd [#allocation6], %s26
      %s28 = sshll.u32 [#allocation5], 4
      %s29 = int_to_ptr.vmem [resolvable:$true] %s28
      %34 = dma.hbm_to_vmem [thread:$0]  %s1, 256, %s29, [#allocation6], 64, 64, 4
    $region9: #{tpu_custom_call.1} parent=1 // pred_fallthru
      _
    // Predicated region
    $region10: #{tpu_custom_call.1} parent=1 // pred_check
      _
    $region11: #{tpu_custom_call.1} parent=1 // pred_check_branch
      %36 = sbr.rel (0) target = $region13
    $region12: #{tpu_custom_call.1} parent=1 // pred_region
      _
    $region13: #{tpu_custom_call.1} parent=1 // pred_fallthru
      _
    // Predicated region
    $region14: #{tpu_custom_call.1} parent=1 // pred_check
      _
    $region15: #{tpu_custom_call.1} parent=1 // pred_check_branch
      %38 = sbr.rel (0) target = $region17
    $region16: #{tpu_custom_call.1} parent=1 // pred_region
      %39 = dma.done [#allocation3], 128
    $region17: #{tpu_custom_call.1} parent=1 // pred_fallthru
      _
    // Predicated region
    $region18: #{tpu_custom_call.1} parent=1 // pred_check
      _
    $region19: #{tpu_custom_call.1} parent=1 // pred_check_branch
      %41 = sbr.rel (0) target = $region21
    $region20: #{tpu_custom_call.1} parent=1 // pred_region
      %42 = dma.done [#allocation6], 256
    $region21: #{tpu_custom_call.1} parent=1 // pred_fallthru
      _
    %v44 = vld [vmem:[#allocation2] sm:$0xf]
    %v45 = vld [vmem:[#allocation2 + $0x4] sm:$0xf]
    %v46 = vld [vmem:[#allocation5] sm:$0xf]
    %v47 = vld [vmem:[#allocation5 + $0x4] sm:$0xf]
    %v48 = vld [vmem:[#allocation5 + $0x8] sm:$0xf]
    %v49 = vld [vmem:[#allocation5 + $0xc] sm:$0xf]
    %v50 = vld [vmem:[%s2] sm:$0x1]
    %v52 = vlaneseq
    %v53 = vshrl.u32 %v52, 7
    %v54 = vsub.s32 0, %v53
    %v55 = vrot.slane %v50, %v54
    %v59 = vunpack.c.l.b16 %v44
    %v60 = vunpack.c.l.b16 %v45
    %v61 = vpack.c.b16 %v60, %v59
    %v66 = vunpack.c.l.b16 %v46
    %v67 = vunpack.c.l.b16 %v47
    %v68 = vunpack.c.l.b16 %v48
    %v69 = vunpack.c.l.b16 %v49
    %v70 = vpack.c.b16 %v67, %v66
    %v71 = vpack.c.b16 %v69, %v68
    %vm74 = vcmask 261120
    %v76 = vsel %vm74, %v61, 0
    %78 = vmatprep.subr.bf16.mxu0 0
    %79 = vmatpush1.bf16.msra.mxu0 %v70
    %80 = vmatprep.subr.bf16.mxu0 0
    %81 = vmatpush1.bf16.msra.mxu0 %v71
    %82 = vmatprep.subr.bf16.mxu0 0
    %83 = vmatpush1.bf16.msra.mxu0 0
    %84 = vmatprep.subr.bf16.mxu0 0
    %85 = vmatpush1.bf16.msra.mxu0 0
    %86 = vmatprep.subr.bf16.mxu0 0
    %87 = vmatpush1.bf16.msra.mxu0 0
    %88 = vmatprep.subr.bf16.mxu0 0
    %89 = vmatpush1.bf16.msra.mxu0 0
    %90 = vmatprep.subr.bf16.mxu0 0
    %91 = vmatpush1.bf16.msra.mxu0 0
    %92 = vmatprep.subr.bf16.mxu0 0
    %93 = vmatpush1.bf16.msra.mxu0 0
    %94 = vmatprep.subr.bf16.mxu0 0
    %95 = vmatpush1.bf16.msra.mxu0 0
    %96 = vmatprep.subr.bf16.mxu0 0
    %97 = vmatpush1.bf16.msra.mxu0 0
    %98 = vmatprep.subr.bf16.mxu0 0
    %99 = vmatpush1.bf16.msra.mxu0 0
    %100 = vmatprep.subr.bf16.mxu0 0
    %101 = vmatpush1.bf16.msra.mxu0 0
    %102 = vmatprep.subr.bf16.mxu0 0
    %103 = vmatpush1.bf16.msra.mxu0 0
    %104 = vmatprep.subr.bf16.mxu0 0
    %105 = vmatpush1.bf16.msra.mxu0 0
    %106 = vmatprep.subr.bf16.mxu0 0
    %107 = vmatpush1.bf16.msra.mxu0 0
    %108 = vmatprep.subr.bf16.mxu0 0
    %109 = vmatpush1.bf16.msra.mxu0 0
    %110 = vmatprep.mubr.bf16.mxu0 0
    %111 = vmatmul.mubr.bf16.gmra.mrb[0].mxu0 %v76
    %v112 = vpop.f32.mrb[0].mxu0
    %v113 = vadd.f32 %v55, %v112
    %v114 = vpop.f32.mrb[0].mxu0
    %v115 = vpop.f32.mrb[0].mxu0
    %v116 = vadd.f32 %v55, %v115
    %v117 = vpop.f32.mrb[0].mxu0
    %118 = vdwg.mxu0
    %119 = vmax.xlane.f32.xlu0 %v113
    %v120 = vpop.xlane.xlu0 %119
    %121 = vmax.xlane.f32.xlu0 %v116
    %v122 = vpop.xlane.xlu0 %121
    %v123 = vsub.f32 %v113, %v120
    %v124 = vsub.f32 %v116, %v122
    %v125 = vmul.f32 %v123, 1.442695
    %v126 = vpow.pop %v125
    %v127 = vmul.f32 %v124, 1.442695
    %v128 = vpow.pop %v127
    %129 = vadd.xlane.f32.xlu0 %v126
    %v130 = vpop.xlane.xlu0 %129
    %131 = vadd.xlane.f32.xlu0 %v128
    %v132 = vpop.xlane.xlu0 %131
    %v133 = vlog2.pop %v130
    %v134 = vmul.f32 %v133, 0.6931472
    %v135 = vlog2.pop %v132
    %v136 = vmul.f32 %v135, 0.6931472
    %v137 = vsub.f32 %v123, %v134
    %v138 = vsub.f32 %v124, %v136
    %v139 = vlaneseq
    %v140 = vand.u32 %v139, 127
    %vm141 = vcmp.ge.f32.partialorder %v123, 0.0
    %vm142 = vcmp.ge.f32.partialorder %v124, 0.0
    %v143 = vsel %vm141, %v140, 128
    %v144 = vsel %vm142, %v140, 128
    %v145 = vand.u32 %v143, 65535
    %v146 = vshra.s32 %v143, 16
    %v147 = vcvt.s32.f32 %v145
    %v148 = vcvt.s32.f32 %v146
    %149 = vmin.xlane.f32.xlu0 %v148
    %v150 = vpop.xlane.xlu0 %149
    %vm151 = vcmp.eq.f32.partialorder %v148, %v150
    %v152 = vsel %vm151, %v147, inf
    %153 = vmin.xlane.f32.xlu0 %v152
    %v154 = vpop.xlane.xlu0 %153
    %v155 = vcvt.f32.s32 %v154
    %v156 = vcvt.f32.s32 %v150
    %v157 = vshll.u32 %v156, 16
    %v158 = vadd.s32 %v157, %v155
    %v159 = vand.u32 %v144, 65535
    %v160 = vshra.s32 %v144, 16
    %v161 = vcvt.s32.f32 %v159
    %v162 = vcvt.s32.f32 %v160
    %163 = vmin.xlane.f32.xlu0 %v162
    %v164 = vpop.xlane.xlu0 %163
    %vm165 = vcmp.eq.f32.partialorder %v162, %v164
    %v166 = vsel %vm165, %v161, inf
    %167 = vmin.xlane.f32.xlu0 %v166
    %v168 = vpop.xlane.xlu0 %167
    %v169 = vcvt.f32.s32 %v168
    %v170 = vcvt.f32.s32 %v164
    %v171 = vshll.u32 %v170, 16
    %v172 = vadd.s32 %v171, %v169
    %vm173 = vcmp.eq.s32.totalorder %v140, 9
    %v174 = vcvt.s32.f32 %v158
    %v175 = vcvt.s32.f32 %v172
    %v176 = vsel %vm173, %v174, %v137
    %v177 = vsel %vm173, %v175, %v138
    %178 = vst [vmem:[#allocation7] sm:$0xff] %v176
    %179 = vst [vmem:[#allocation7 + $0x8] sm:$0xff] %v177
    // Predicated region
    $region22: #{tpu_custom_call.1} parent=1 // pred_check
      _
    $region23: #{tpu_custom_call.1} parent=1 // pred_check_branch
      %181 = sbr.rel (0) target = $region25
    $region24: #{tpu_custom_call.1} parent=1 // pred_region
      %s183 = ssub.s32 256, 256
      %184 = vsyncadd [#allocation4], %s183
      %s185 = sshll.u32 [#allocation7], 4
      %s186 = int_to_ptr.vmem [resolvable:$true] %s185
      %191 = dma.vmem_to_hbm [thread:$0]  %s186, 256, %s3, [#allocation4], 128, 128, 8
    $region25: #{tpu_custom_call.1} parent=1 // pred_fallthru
      _
    // Predicated region
    $region26: #{tpu_custom_call.1} parent=1 // pred_check
      _
    $region27: #{tpu_custom_call.1} parent=1 // pred_check_branch
      %193 = sbr.rel (0) target = $region29
    $region28: #{tpu_custom_call.1} parent=1 // pred_region
      %194 = dma.done [#allocation4], 256
    $region29: #{tpu_custom_call.1} parent=1 // pred_fallthru
      _
    %195 = vsyncpa [#allocation3], 1
    %196 = vsyncpa [#allocation6], 1
    %197 = vsyncpa [#allocation4], 1

</llo_original>
